<compile_context>
chip_gen: v6e
topology: v6e:2x2x1
jax: 0.10.0
libtpu: 0.0.40
codegen_flags: <defaults>
</compile_context>

<pallas_src>
import functools

import jax
import jax.numpy as jnp
from jax.experimental import pallas as pl
from jax.experimental.pallas import tpu as pltpu

_NEG_INF = -1e30  # fill for padded d_model lanes: exp() underflows to 0, never wins max


def _round_up(x, m):
    return (x + m - 1) // m * m


def _vmem_budget_bytes():
    """Safe scoped-VMEM budget: 75% of physical (v7x-safe fallback = 48 MiB)."""
    try:
        phys = int(pltpu.get_tpu_info().vmem_capacity_bytes)
    except Exception:
        phys = 64 << 20  # conservative: assume v7x-sized VMEM
    return min(phys * 3 // 4, 112 << 20)


def _vmem_bytes(tile_m, tile_k, d_pad, out_isz=4, x_isz=4):
    """Double-buffered working set + resident f32 accumulator."""
    return (2 * tile_m * tile_k * x_isz      # x tile (kept f32, cast in kernel)
            + 2 * tile_k * d_pad * 2         # w tile (bf16)
            + 2 * d_pad * 4                  # bias
            + 2 * tile_m * d_pad * out_isz   # output tile
            + tile_m * d_pad * 4)            # f32 accumulator scratch


def _generator_kernel(x_ref, w_ref, b_ref, o_ref, acc_ref):
    # x_ref: (TM, TK) f32   w_ref: (TK, Dp) bf16   b_ref: (1, Dp) f32
    # o_ref: (TM, Dp)       acc_ref: (TM, Dp) f32
    k = pl.program_id(1)

    @pl.when(k == 0)
    def _():
        acc_ref[...] = jnp.zeros_like(acc_ref)

    # MXU inner loop: bf16 operands (x cast in-register), f32 accumulation.
    acc_ref[...] += jnp.dot(
        x_ref[...].astype(jnp.bfloat16),
        w_ref[...],
        preferred_element_type=jnp.float32,
    )

    @pl.when(k == pl.num_programs(1) - 1)
    def _():
        # Bias add + stable log-softmax, once per output tile (epilogue).
        logits = acc_ref[...] + b_ref[...]
        mx = jnp.max(logits, axis=-1, keepdims=True)
        shifted = logits - mx
        lse = jnp.log(jnp.sum(jnp.exp(shifted), axis=-1, keepdims=True))
        o_ref[...] = (shifted - lse).astype(o_ref.dtype)


@functools.partial(
    jax.jit,
    static_argnames=("tile_m", "tile_k", "d_model", "out_dtype", "vmem_limit"),
)
def _generator_forward_2d(x2d, w_p, b_p, *, tile_m, tile_k, d_model, out_dtype,
                          vmem_limit):
    m, vocab = x2d.shape
    k_pad, d_pad = w_p.shape
    m_pad = _round_up(m, tile_m)

    if m_pad != m or k_pad != vocab:
        # Zero pad: padded vocab cols meet zero weight rows; padded M rows are
        # computed but sliced off below.
        x2d = jnp.pad(x2d, ((0, m_pad - m), (0, k_pad - vocab)))

    num_m = m_pad // tile_m
    num_k = k_pad // tile_k
    x_isz = x2d.dtype.itemsize
    out_isz = jnp.dtype(out_dtype).itemsize

    # w is re-read once per M tile only when K-streamed (num_k > 1); with a
    # single constant-index K block it is DMA'd exactly once.
    w_reads = num_m if num_k > 1 else 1
    cost = pl.CostEstimate(
        flops=2 * m_pad * k_pad * d_pad,
        transcendentals=m_pad * d_pad,  # exp in softmax
        bytes_accessed=(m_pad * k_pad * x_isz
                        + w_reads * k_pad * d_pad * 2
                        + d_pad * 4
                        + m_pad * d_pad * out_isz),
    )

    out = pl.pallas_call(
        _generator_kernel,
        out_shape=jax.ShapeDtypeStruct((m_pad, d_pad), out_dtype),
        grid_spec=pltpu.PrefetchScalarGridSpec(
            num_scalar_prefetch=0,
            grid=(num_m, num_k),
            in_specs=[
                pl.BlockSpec((tile_m, tile_k), lambda i, k: (i, k)),
                pl.BlockSpec((tile_k, d_pad), lambda i, k: (k, 0)),
                pl.BlockSpec((1, d_pad), lambda i, k: (0, 0)),
            ],
            out_specs=pl.BlockSpec((tile_m, d_pad), lambda i, k: (i, 0)),
            scratch_shapes=[pltpu.VMEM((tile_m, d_pad), jnp.float32)],
        ),
        compiler_params=pltpu.CompilerParams(
            dimension_semantics=("parallel", "arbitrary"),
            vmem_limit_bytes=int(vmem_limit),
        ),
        cost_estimate=cost,
    )(x2d, w_p, b_p)

    return out[:m, :d_model]


class PallasGenerator:
    """log_softmax(x @ w + b, axis=-1) with one-time weight prep.

    w: (vocab, d_model) [transposed nn.Linear weight], b: (d_model,)
    """

    def __init__(self, w, b, *, tile_m=1024, tile_k=2048):
        vocab, d_model = w.shape
        self.vocab, self.d_model = vocab, d_model
        self.d_pad = _round_up(d_model, 128)

        budget = _vmem_budget_bytes()
        tile_k = min(tile_k, _round_up(vocab, 128))
        tile_m_max = _round_up(tile_m, 16)
        # Shrink the contraction tile, then the M tile, until the
        # double-buffered working set fits the per-chip VMEM budget.
        while _vmem_bytes(tile_m_max, tile_k, self.d_pad) > budget and tile_k > 512:
            tile_k = max(512, _round_up(tile_k // 2, 128))
        while _vmem_bytes(tile_m_max, tile_k, self.d_pad) > budget and tile_m_max > 128:
            tile_m_max //= 2

        self.tile_k = tile_k
        self.tile_m_max = tile_m_max
        self.k_pad = _round_up(vocab, tile_k)
        self.vmem_limit = budget

        # ---- one-time weight / bias pad + bf16 cast (not per call) --------
        if self.k_pad == vocab and self.d_pad == d_model:
            w_p = w.astype(jnp.bfloat16)
        else:
            w_p = jnp.zeros((self.k_pad, self.d_pad), jnp.bfloat16)
            w_p = w_p.at[:vocab, :d_model].set(w.astype(jnp.bfloat16))
        if self.d_pad == d_model:
            b_p = b.astype(jnp.float32).reshape(1, d_model)
        else:
            b_p = jnp.full((1, self.d_pad), _NEG_INF, jnp.float32)
            b_p = b_p.at[0, :d_model].set(b.astype(jnp.float32))
        self.w_p = jax.device_put(w_p)
        self.b_p = jax.device_put(b_p)

    def __call__(self, x, *, out_dtype=None):
        assert x.shape[-1] == self.vocab
        out_dtype = jnp.dtype(out_dtype if out_dtype is not None else x.dtype)
        lead = x.shape[:-1]
        x2d = x.reshape(-1, self.vocab)
        m = x2d.shape[0]

        tile_m = min(self.tile_m_max, _round_up(m, 16))
        # Prefer >=2 M tiles when a single big tile would swallow the M axis,
        # so both v7x TensorCores get work ("parallel" M axis).
        if _round_up(m, tile_m) == tile_m and tile_m > 256:
            tile_m = _round_up((m + 1) // 2, 16)

        out2d = _generator_forward_2d(
            x2d, self.w_p, self.b_p,
            tile_m=tile_m, tile_k=self.tile_k, d_model=self.d_model,
            out_dtype=out_dtype, vmem_limit=self.vmem_limit)
        return out2d.reshape(*lead, self.d_model)


if __name__ == "__main__":
    # Module config (small synthetic sizes): proj = nn.Linear(vocab, d_model)
    batch, seq, vocab, d_model = 2, 8, 32, 16

    key = jax.random.PRNGKey(0)
    kx, kw, kb = jax.random.split(key, 3)

    # nn.Linear-style init: uniform(-1/sqrt(fan_in), 1/sqrt(fan_in)), fan_in = vocab.
    bound = 1.0 / (vocab ** 0.5)
    # PyTorch stores weight as (d_model, vocab); we keep the transposed
    # (vocab, d_model) layout so the kernel matmul is (M, V) @ (V, D).
    w = jax.random.uniform(kw, (vocab, d_model), jnp.float32, -bound, bound)
    b = jax.random.uniform(kb, (d_model,), jnp.float32, -bound, bound)
    x = jax.random.normal(kx, (batch, seq, vocab), jnp.float32)

    gen = PallasGenerator(w, b)
    out = gen(x)
    out = jax.block_until_ready(out)

    # Cross-check against pure-JAX references.
    ref_f32 = jax.nn.log_softmax(x @ w + b, axis=-1)
    ref_bf16 = jax.nn.log_softmax(
        x.astype(jnp.bfloat16).astype(jnp.float32)
        @ w.astype(jnp.bfloat16).astype(jnp.float32) + b, axis=-1)

    assert out.shape == (batch, seq, d_model)
    assert jnp.all(jnp.isfinite(out))
    # Kernel uses bf16 MXU inputs with f32 accumulation.
    assert jnp.allclose(out, ref_bf16, atol=1e-4, rtol=1e-4)
    assert jnp.allclose(out, ref_f32, atol=2e-2, rtol=2e-2)

    print("KERNEL_OK")
</pallas_src>

<mosaic_0001>
module attributes {stable_mosaic.version = 11 : i64} {
  func.func @_generator_kernel(%arg0: i32, %arg1: i32, %arg2: memref<16x128xf32, #tpu.memory_space<vmem>>, %arg3: memref<128x128xbf16, #tpu.memory_space<vmem>>, %arg4: memref<1x128xf32, #tpu.memory_space<vmem>>, %arg5: memref<16x128xf32, #tpu.memory_space<vmem>>, %arg6: memref<16x128xf32, #tpu.memory_space<vmem>>) attributes {dimension_semantics = [#tpu.dimension_semantics<parallel>, #tpu.dimension_semantics<arbitrary>], iteration_bounds = array<i64: 1, 1>, scalar_prefetch = 0 : i64, scratch_operands = 1 : i64, tpu.core_type = #tpu.core_type<tc>, window_params = [{transform_indices = @transform_0, window_bounds = array<i64: 16, 128>}, {transform_indices = @transform_1, window_bounds = array<i64: 128, 128>}, {pipeline_mode = #tpu.pipeline_mode<synchronous>, transform_indices = @transform_2, window_bounds = array<i64: 1, 128>}, {transform_indices = @transform_3, window_bounds = array<i64: 16, 128>}]} {
    %c0_i32 = arith.constant 0 : i32
    %0 = arith.cmpi eq, %arg1, %c0_i32 : i32
    %1 = arith.extui %0 : i1 to i32
    %c0_i32_0 = arith.constant 0 : i32
    %2 = arith.cmpi ne, %1, %c0_i32_0 : i32
    scf.if %2 {
      %cst_10 = arith.constant 0.000000e+00 : f32
      %13 = vector.broadcast %cst_10 : f32 to vector<16x128xf32>
      %c0_11 = arith.constant 0 : index
      %c0_12 = arith.constant 0 : index
      %14 = vector.load %arg6[%c0_11, %c0_12] : memref<16x128xf32, #tpu.memory_space<vmem>>, vector<16x128xf32>
      tpu.vector_store %arg6[%c0_11, %c0_12], %13 {strides = array<i32>} : memref<16x128xf32, #tpu.memory_space<vmem>>, vector<16x128xf32>,
    } else {
    }
    %c0 = arith.constant 0 : index
    %c0_1 = arith.constant 0 : index
    %3 = vector.load %arg6[%c0, %c0_1] : memref<16x128xf32, #tpu.memory_space<vmem>>, vector<16x128xf32>
    %c0_2 = arith.constant 0 : index
    %c0_3 = arith.constant 0 : index
    %4 = vector.load %arg2[%c0_2, %c0_3] : memref<16x128xf32, #tpu.memory_space<vmem>>, vector<16x128xf32>
    %5 = arith.truncf %4 : vector<16x128xf32> to vector<16x128xbf16>
    %c0_4 = arith.constant 0 : index
    %c0_5 = arith.constant 0 : index
    %6 = vector.load %arg3[%c0_4, %c0_5] : memref<128x128xbf16, #tpu.memory_space<vmem>>, vector<128x128xbf16>
    %cst = arith.constant dense<0.000000e+00> : vector<16x128xf32>
    %7 = tpu.matmul %5, %6, %cst {dimension_numbers = #tpu.dot_dimension_numbers<[1], [0], [0], [1], [0, 0, 1, 1], [], []>} : vector<16x128xbf16>, vector<128x128xbf16>, vector<16x128xf32> -> vector<16x128xf32>
    %8 = arith.addf %3, %7 : vector<16x128xf32>
    %c0_6 = arith.constant 0 : index
    %c0_7 = arith.constant 0 : index
    %9 = vector.load %arg6[%c0_6, %c0_7] : memref<16x128xf32, #tpu.memory_space<vmem>>, vector<16x128xf32>
    tpu.vector_store %arg6[%c0_6, %c0_7], %8 {strides = array<i32>} : memref<16x128xf32, #tpu.memory_space<vmem>>, vector<16x128xf32>,
    %c0_i32_8 = arith.constant 0 : i32
    %10 = arith.cmpi eq, %arg1, %c0_i32_8 : i32
    %11 = arith.extui %10 : i1 to i32
    %c0_i32_9 = arith.constant 0 : i32
    %12 = arith.cmpi ne, %11, %c0_i32_9 : i32
    scf.if %12 {
      %c0_10 = arith.constant 0 : index
      %c0_11 = arith.constant 0 : index
      %13 = vector.load %arg6[%c0_10, %c0_11] : memref<16x128xf32, #tpu.memory_space<vmem>>, vector<16x128xf32>
      %c0_12 = arith.constant 0 : index
      %c0_13 = arith.constant 0 : index
      %14 = vector.load %arg4[%c0_12, %c0_13] : memref<1x128xf32, #tpu.memory_space<vmem>>, vector<1x128xf32>
      %15 = vector.broadcast %14 : vector<1x128xf32> to vector<16x128xf32>
      %16 = arith.addf %13, %15 : vector<16x128xf32>
      %cst_14 = arith.constant dense<0xFF800000> : vector<16xf32>
      %17 = vector.multi_reduction <maximumf>, %16, %cst_14 [1] : vector<16x128xf32> to vector<16xf32>
      %18 = vector.shape_cast %17 : vector<16xf32> to vector<16x1xf32>
      %19 = vector.broadcast %18 : vector<16x1xf32> to vector<16x128xf32>
      %20 = arith.subf %16, %19 : vector<16x128xf32>
      %21 = math.exp %20 : vector<16x128xf32>
      %cst_15 = arith.constant dense<0.000000e+00> : vector<16xf32>
      %22 = vector.multi_reduction <add>, %21, %cst_15 [1] : vector<16x128xf32> to vector<16xf32>
      %23 = vector.shape_cast %22 : vector<16xf32> to vector<16x1xf32>
      %24 = math.log %23 : vector<16x1xf32>
      %25 = vector.broadcast %24 : vector<16x1xf32> to vector<16x128xf32>
      %26 = arith.subf %20, %25 : vector<16x128xf32>
      %c0_16 = arith.constant 0 : index
      %c0_17 = arith.constant 0 : index
      %27 = vector.load %arg5[%c0_16, %c0_17] : memref<16x128xf32, #tpu.memory_space<vmem>>, vector<16x128xf32>
      tpu.vector_store %arg5[%c0_16, %c0_17], %26 {strides = array<i32>} : memref<16x128xf32, #tpu.memory_space<vmem>>, vector<16x128xf32>,
    } else {
    }
    return
  }
  func.func @transform_0(%arg0: i32, %arg1: i32) -> (i32, i32) {
    %c0_i32 = arith.constant 0 : i32
    return %arg0, %arg1 : i32, i32
  }
  func.func @transform_1(%arg0: i32, %arg1: i32) -> (i32, i32) {
    %c0_i32 = arith.constant 0 : i32
    %c0_i32_0 = arith.constant 0 : i32
    return %arg1, %c0_i32 : i32, i32
  }
  func.func @transform_2(%arg0: i32, %arg1: i32) -> (i32, i32) {
    %c0_i32 = arith.constant 0 : i32
    %c0_i32_0 = arith.constant 0 : i32
    %c0_i32_1 = arith.constant 0 : i32
    return %c0_i32, %c0_i32_0 : i32, i32
  }
  func.func @transform_3(%arg0: i32, %arg1: i32) -> (i32, i32) {
    %c0_i32 = arith.constant 0 : i32
    %c0_i32_0 = arith.constant 0 : i32
    return %arg0, %c0_i32 : i32, i32
  }
}

</mosaic_0001>

<llo_original>
// kernel: _generator_forward_2d.1
$region0: #{_generator_forward_2d.1}
  #allocation0 [shape = 'u32[]', space=smem, size = 0x4, offset = 0x4, fixed_abs, tag = 'smem constant byte address 0x4 - core index']
  #allocation1 [shape = 'u32[144,128]{1,0:T(1,128)}', space=vmem, size = 0x12000, scoped, tag = 'internal scratch']
  #allocation2 [shape = 'f32[16,128]{1,0:T(8,128)}', space=vmem, size = 0x2000, scoped, tag = 'scratch operand']
  %s0 = inlined_call_operand.vmem [shape: f32[16,128], index: 0, kind: input, shape index: {}]
  %s1 = inlined_call_operand.hbm [shape: bf16[128,128], index: 1, kind: input, shape index: {}]
  %s2 = inlined_call_operand.vmem [shape: f32[1,128], index: 2, kind: input, shape index: {}]
  %s3 = inlined_call_operand.hbm [shape: f32[16,128], index: 3, kind: output, shape index: {}]
  %s4 = sld [smem:[#allocation0]]
  $region34: #{_generator_forward_2d.1} parent=0
    _
  %s6 = ssub.s32 1, %s4
  %s7 = scalar_select 0, %s6, %s4
  $region1: #{_generator_forward_2d.1} parent=0
    #allocation3 [shape = 'u8[32768]{0}', space=vmem, size = 0x8000, scoped, tag = 'input window, operand 1, single buffered']
    #allocation4 [shape = 's32[1]{0}', space=sflag, size = 0x4, scoped, tag = 'scoped memory for _generator_forward_2d.1']
    #allocation5 [shape = 's32[1]{0}', space=sflag, size = 0x4, scoped, tag = 'scoped memory for _generator_forward_2d.1']
    #allocation6 [shape = 'u8[8192]{0}', space=vmem, size = 0x2000, scoped, tag = 'output window, operand 0, single buffered']
    %8 = vsyncpa [#allocation4], 0
    %9 = vsyncpa [#allocation5], 0
    // Predicated region
    $region2: #{_generator_forward_2d.1} parent=1 // pred_check
      _
    $region3: #{_generator_forward_2d.1} parent=1 // pred_check_branch
      %11 = sbr.rel (0) target = $region5
    $region4: #{_generator_forward_2d.1} parent=1 // pred_region
      _
    $region5: #{_generator_forward_2d.1} parent=1 // pred_fallthru
      _
    // Predicated region
    $region6: #{_generator_forward_2d.1} parent=1 // pred_check
      _
    $region7: #{_generator_forward_2d.1} parent=1 // pred_check_branch
      %13 = sbr.rel (0) target = $region9
    $region8: #{_generator_forward_2d.1} parent=1 // pred_region
      %s15 = ssub.s32 1024, 1024
      %16 = vsyncadd [#allocation4], %s15
      %s17 = sshll.u32 [#allocation3], 4
      %s18 = int_to_ptr.vmem [resolvable:$true] %s17
      %23 = dma.hbm_to_vmem [thread:$0]  %s1, 1024, %s18, [#allocation4], 64, 64, 4
    $region9: #{_generator_forward_2d.1} parent=1 // pred_fallthru
      _
    // Predicated region
    $region10: #{_generator_forward_2d.1} parent=1 // pred_check
      _
    $region11: #{_generator_forward_2d.1} parent=1 // pred_check_branch
      %25 = sbr.rel (0) target = $region13
    $region12: #{_generator_forward_2d.1} parent=1 // pred_region
      _
    $region13: #{_generator_forward_2d.1} parent=1 // pred_fallthru
      _
    // Predicated region
    $region14: #{_generator_forward_2d.1} parent=1 // pred_check
      _
    $region15: #{_generator_forward_2d.1} parent=1 // pred_check_branch
      %27 = sbr.rel (0) target = $region17
    $region16: #{_generator_forward_2d.1} parent=1 // pred_region
      %28 = dma.done [#allocation4], 1024
    $region17: #{_generator_forward_2d.1} parent=1 // pred_fallthru
      _
    %p30 = scmp.eq.s32.totalorder 0, 0
    // Predicated region
    $region18: #{_generator_forward_2d.1} parent=1 // pred_check
      %p31 = pneg %p30
    $region19: #{_generator_forward_2d.1} parent=1 // pred_check_branch
      %33 = sbr.rel (%p31) target = $region21
    $region20: #{_generator_forward_2d.1} parent=1 // pred_region
      %34 = vst [vmem:[#allocation2] sm:$0xff] 0.0
      %35 = vst [vmem:[#allocation2 + $0x8] sm:$0xff] 0.0
    $region21: #{_generator_forward_2d.1} parent=1 // pred_fallthru
      _
    %v36 = vld [vmem:[#allocation2] sm:$0xff]
    %v37 = vld [vmem:[#allocation2 + $0x8] sm:$0xff]
    %v38 = vld [vmem:[%s0] sm:$0xff]
    %v39 = vld [vmem:[%s0 + $0x8] sm:$0xff]
    %v40 = vpack.c.bf16 %v39, %v38
    %v41 = vld [vmem:[#allocation3] sm:$0xf]
    %v42 = vld [vmem:[#allocation3 + $0x4] sm:$0xf]
    %v43 = vld [vmem:[#allocation3 + $0x8] sm:$0xf]
    %v44 = vld [vmem:[#allocation3 + $0xc] sm:$0xf]
    %v45 = vld [vmem:[#allocation3 + $0x10] sm:$0xf]
    %v46 = vld [vmem:[#allocation3 + $0x14] sm:$0xf]
    %v47 = vld [vmem:[#allocation3 + $0x18] sm:$0xf]
    %v48 = vld [vmem:[#allocation3 + $0x1c] sm:$0xf]
    %v49 = vld [vmem:[#allocation3 + $0x20] sm:$0xf]
    %v50 = vld [vmem:[#allocation3 + $0x24] sm:$0xf]
    %v51 = vld [vmem:[#allocation3 + $0x28] sm:$0xf]
    %v52 = vld [vmem:[#allocation3 + $0x2c] sm:$0xf]
    %v53 = vld [vmem:[#allocation3 + $0x30] sm:$0xf]
    %v54 = vld [vmem:[#allocation3 + $0x34] sm:$0xf]
    %v55 = vld [vmem:[#allocation3 + $0x38] sm:$0xf]
    %v56 = vld [vmem:[#allocation3 + $0x3c] sm:$0xf]
    %v73 = vunpack.c.l.b16 %v41
    %v74 = vunpack.c.l.b16 %v42
    %v75 = vunpack.c.l.b16 %v43
    %v76 = vunpack.c.l.b16 %v44
    %v77 = vunpack.c.l.b16 %v45
    %v78 = vunpack.c.l.b16 %v46
    %v79 = vunpack.c.l.b16 %v47
    %v80 = vunpack.c.l.b16 %v48
    %v81 = vunpack.c.l.b16 %v49
    %v82 = vunpack.c.l.b16 %v50
    %v83 = vunpack.c.l.b16 %v51
    %v84 = vunpack.c.l.b16 %v52
    %v85 = vunpack.c.l.b16 %v53
    %v86 = vunpack.c.l.b16 %v54
    %v87 = vunpack.c.l.b16 %v55
    %v88 = vunpack.c.l.b16 %v56
    %v89 = vpack.c.b16 %v74, %v73
    %v90 = vpack.c.b16 %v76, %v75
    %v91 = vpack.c.b16 %v78, %v77
    %v92 = vpack.c.b16 %v80, %v79
    %v93 = vpack.c.b16 %v82, %v81
    %v94 = vpack.c.b16 %v84, %v83
    %v95 = vpack.c.b16 %v86, %v85
    %v96 = vpack.c.b16 %v88, %v87
    %105 = vmatprep.subr.bf16.mxu0 0
    %106 = vmatpush1.bf16.msra.mxu0 %v96
    %107 = vmatprep.subr.bf16.mxu0 0
    %108 = vmatpush1.bf16.msra.mxu0 %v95
    %109 = vmatprep.subr.bf16.mxu0 0
    %110 = vmatpush1.bf16.msra.mxu0 %v94
    %111 = vmatprep.subr.bf16.mxu0 0
    %112 = vmatpush1.bf16.msra.mxu0 %v93
    %113 = vmatprep.subr.bf16.mxu0 0
    %114 = vmatpush1.bf16.msra.mxu0 %v92
    %115 = vmatprep.subr.bf16.mxu0 0
    %116 = vmatpush1.bf16.msra.mxu0 %v91
    %117 = vmatprep.subr.bf16.mxu0 0
    %118 = vmatpush1.bf16.msra.mxu0 %v90
    %119 = vmatprep.subr.bf16.mxu0 0
    %120 = vmatpush1.bf16.msra.mxu0 %v89
    %121 = vmatprep.subr.bf16.mxu0 0
    %122 = vmatpush2.bf16.msra.mxu0 0
    %123 = vmatprep.subr.bf16.mxu0 0
    %124 = vmatpush2.bf16.msra.mxu0 0
    %125 = vmatprep.subr.bf16.mxu0 0
    %126 = vmatpush2.bf16.msra.mxu0 0
    %127 = vmatprep.subr.bf16.mxu0 0
    %128 = vmatpush2.bf16.msra.mxu0 0
    %129 = vmatprep.subr.bf16.mxu0 0
    %130 = vmatpush2.bf16.msra.mxu0 0
    %131 = vmatprep.subr.bf16.mxu0 0
    %132 = vmatpush2.bf16.msra.mxu0 0
    %133 = vmatprep.subr.bf16.mxu0 0
    %134 = vmatpush2.bf16.msra.mxu0 0
    %135 = vmatprep.subr.bf16.mxu0 0
    %136 = vmatpush2.bf16.msra.mxu0 0
    %137 = vmatprep.mubr.bf16.mxu0 0
    %138 = vmatmul.mubr.bf16.gmra.mxu0 %v40
    %v139 = vpop.f32.mrf.mxu0
    %v140 = vadd.f32 0.0, %v139
    %v141 = vpop.f32.mrf.mxu0
    %v142 = vpop.f32.mrf.mxu0
    %v143 = vadd.f32 0.0, %v142
    %v144 = vpop.f32.mrf.mxu0
    %145 = vdwg.mxu0
    %v146 = vadd.f32 %v36, %v140
    %v147 = vadd.f32 %v37, %v143
    %148 = vst [vmem:[#allocation2] sm:$0xff] %v146
    %149 = vst [vmem:[#allocation2 + $0x8] sm:$0xff] %v147
    // Predicated region
    $region22: #{_generator_forward_2d.1} parent=1 // pred_check
      %p150 = pneg %p30
    $region23: #{_generator_forward_2d.1} parent=1 // pred_check_branch
      %152 = sbr.rel (%p150) target = $region25
    $region24: #{_generator_forward_2d.1} parent=1 // pred_region
      %v153 = vld [vmem:[#allocation2] sm:$0xff]
      %v154 = vld [vmem:[#allocation2 + $0x8] sm:$0xff]
      %v155 = vld [vmem:[%s2] sm:$0x1]
      %v157 = vlaneseq
      %v158 = vshrl.u32 %v157, 7
      %v159 = vsub.s32 0, %v158
      %v160 = vrot.slane %v155, %v159
      %v162 = vadd.f32 %v153, %v160
      %v163 = vadd.f32 %v154, %v160
      %164 = vmax.xlane.f32.xlu0 %v162
      %v165 = vpop.xlane.xlu0 %164
      %166 = vmax.xlane.f32.xlu0 %v163
      %v167 = vpop.xlane.xlu0 %166
      %v168 = vsub.f32 %v162, %v165
      %v169 = vsub.f32 %v163, %v167
      %v170 = vmul.f32 %v168, 1.442695
      %v171 = vpow.pop %v170
      %v172 = vmul.f32 %v169, 1.442695
      %v173 = vpow.pop %v172
      %174 = vadd.xlane.f32.xlu0 %v171
      %v175 = vpop.xlane.xlu0 %174
      %176 = vadd.xlane.f32.xlu0 %v173
      %v177 = vpop.xlane.xlu0 %176
      %v178 = vlog2.pop %v175
      %v179 = vmul.f32 %v178, 0.6931472
      %v180 = vlog2.pop %v177
      %v181 = vmul.f32 %v180, 0.6931472
      %v182 = vsub.f32 %v168, %v179
      %v183 = vsub.f32 %v169, %v181
      %184 = vst [vmem:[#allocation6] sm:$0xff] %v182
      %185 = vst [vmem:[#allocation6 + $0x8] sm:$0xff] %v183
    $region25: #{_generator_forward_2d.1} parent=1 // pred_fallthru
      _
    // Predicated region
    $region26: #{_generator_forward_2d.1} parent=1 // pred_check
      _
    $region27: #{_generator_forward_2d.1} parent=1 // pred_check_branch
      %187 = sbr.rel (0) target = $region29
    $region28: #{_generator_forward_2d.1} parent=1 // pred_region
      %s189 = ssub.s32 256, 256
      %190 = vsyncadd [#allocation5], %s189
      %s191 = sshll.u32 [#allocation6], 4
      %s192 = int_to_ptr.vmem [resolvable:$true] %s191
      %197 = dma.vmem_to_hbm [thread:$0]  %s192, 256, %s3, [#allocation5], 128, 128, 8
    $region29: #{_generator_forward_2d.1} parent=1 // pred_fallthru
      _
    // Predicated region
    $region30: #{_generator_forward_2d.1} parent=1 // pred_check
      _
    $region31: #{_generator_forward_2d.1} parent=1 // pred_check_branch
      %199 = sbr.rel (0) target = $region33
    $region32: #{_generator_forward_2d.1} parent=1 // pred_region
      %200 = dma.done [#allocation5], 256
    $region33: #{_generator_forward_2d.1} parent=1 // pred_fallthru
      _
    %201 = vsyncpa [#allocation4], 1
    %202 = vsyncpa [#allocation5], 1

</llo_original>
